<compile_context>
chip_gen: v7x
topology: tpu7x:2x2x1
jax: 0.10.0
libtpu: 0.0.40
codegen_flags: <defaults>
</compile_context>

<pallas_src>
import functools

import jax
import jax.numpy as jnp
from jax.experimental import pallas as pl
from jax.experimental.pallas import tpu as pltpu

BN_EPS = 1e-5
LANE = 128


def _value_net_kernel(scal_ref, x_ref, wconv_ref, w1_ref, b1w2_ref, out_ref,
                      *, s_actual: int, inv_n: float):
    # Packed SMEM scalars: [b_conv, gamma, beta, b2]
    b_conv = scal_ref[0]
    gamma = scal_ref[1]
    beta = scal_ref[2]
    b2 = scal_ref[3]

    x = x_ref[...]                                   # (B, C, S_pad) f32
    w_conv = wconv_ref[...]                          # (1, C, S_pad) f32 (pre-broadcast)

    # --- 1x1 Conv2d(C -> 1): elementwise mul + sublane (channel) reduce ---
    z = jnp.sum(x * w_conv, axis=1) + b_conv         # (B, S_pad)

    # --- BatchNorm2d(1), training-mode stats, single pass over valid lanes ---
    lane = jax.lax.broadcasted_iota(jnp.int32, z.shape, 1)
    valid = lane < s_actual                          # padded lanes hold b_conv: mask them
    zm = jnp.where(valid, z, 0.0)
    sum_z = jnp.sum(zm, keepdims=True)               # (1, 1)
    sum_z2 = jnp.sum(zm * zm, keepdims=True)         # (1, 1)
    mean = sum_z * inv_n
    var = sum_z2 * inv_n - mean * mean               # biased variance
    scale = gamma * jax.lax.rsqrt(var + BN_EPS)      # EUP rsqrt, (1, 1)
    shift = beta - mean * scale

    # Folded BN + ReLU in one elementwise pass. Padded lanes are garbage but multiply
    # against zero rows of the K-padded w1, so they never reach the output.
    y = jnp.maximum(z * scale + shift, 0.0)          # (B, S_pad)

    # --- Linear(S -> hidden) on the MXU (K lane-aligned to 128) + ReLU ---
    h = jnp.dot(y, w1_ref[...], preferred_element_type=jnp.float32) + b1w2_ref[0:1, :]
    h = jnp.maximum(h, 0.0)                          # (B, hidden)

    # --- Linear(hidden -> 1) + Tanh as a VPU mul + lane reduce (no N=1 MXU matmul) ---
    o = jnp.sum(h * b1w2_ref[1:2, :], axis=-1, keepdims=True) + b2
    out_ref[...] = jnp.tanh(o)                       # (B, 1)


def value_net_forward(x_nchw, params):
    B, C, H, W = x_nchw.shape
    S = H * W
    S_pad = pl.cdiv(S, LANE) * LANE
    hidden = params["w1"].shape[1]

    # Lane-align the spatial axis (zero-pad; padded lanes are inert).
    x = x_nchw.reshape(B, C, S).astype(jnp.float32)
    x = jnp.pad(x, ((0, 0), (0, 0), (0, S_pad - S)))

    # Pre-broadcast conv weight once in the wrapper (no in-kernel reshape/broadcast).
    w_conv = jnp.broadcast_to(params["w_conv"].reshape(1, C, 1), (1, C, S_pad))
    # Zero-pad w1 along K so padded spatial lanes contribute nothing.
    w1 = jnp.pad(params["w1"].astype(jnp.float32), ((0, S_pad - S), (0, 0)))
    # Pack b1 and w2^T into one small VMEM block: row 0 = b1, row 1 = w2^T.
    b1w2 = jnp.concatenate([params["b1"].reshape(1, hidden),
                            params["w2"].reshape(1, hidden)], axis=0).astype(jnp.float32)
    # Pack remaining scalars into SMEM: [b_conv, gamma, beta, b2].
    scal = jnp.stack([params["b_conv"].reshape(()),
                      params["gamma"].reshape(()),
                      params["beta"].reshape(()),
                      params["b2"].reshape(())]).astype(jnp.float32)

    vmem = pl.BlockSpec(memory_space=pltpu.MemorySpace.VMEM)
    smem = pl.BlockSpec(memory_space=pltpu.MemorySpace.SMEM)

    kernel = functools.partial(_value_net_kernel,
                               s_actual=S, inv_n=1.0 / float(B * S))

    # TODO(synk): for large batches, add a batch grid (BlockSpec tiles, two-pass BN
    # accumulation, 'parallel' batch axis for v7x megacore, bf16 MXU operands on
    # v6e/v7x); at B=2 the whole problem fits one VMEM-resident call.
    return pl.pallas_call(
        kernel,
        out_shape=jax.ShapeDtypeStruct((B, 1), jnp.float32),
        in_specs=[smem, vmem, vmem, vmem, vmem],
        out_specs=vmem,
    )(scal, x, w_conv, w1, b1w2)


def init_params(key, in_features=32, board_length=9):
    """Deterministic PyTorch-style (uniform +-1/sqrt(fan_in)) init."""
    S = board_length ** 2
    ks = jax.random.split(key, 6)

    def u(k, shape, fan_in):
        bound = 1.0 / float(fan_in) ** 0.5
        return jax.random.uniform(k, shape, jnp.float32, -bound, bound)

    return {
        "w_conv": u(ks[0], (in_features, 1), in_features),   # Conv2d 1x1 weight (C_in, 1)
        "b_conv": u(ks[1], (1, 1), in_features),             # Conv2d bias
        "gamma": jnp.ones((1, 1), jnp.float32),              # BatchNorm weight
        "beta": jnp.zeros((1, 1), jnp.float32),              # BatchNorm bias
        "w1": u(ks[2], (S, in_features), S),                 # Linear(S -> hidden)
        "b1": u(ks[3], (1, in_features), S),
        "w2": u(ks[4], (in_features, 1), in_features),       # Linear(hidden -> 1)
        "b2": u(ks[5], (1, 1), in_features),
    }


def value_net_reference(x_nchw, params):
    """Pure-JAX reference mirroring the PyTorch forward (training-mode BN)."""
    B = x_nchw.shape[0]
    z = jnp.einsum("bchw,co->bohw", x_nchw, params["w_conv"]) + params["b_conv"][0, 0]
    mean = jnp.mean(z)
    var = jnp.mean((z - mean) ** 2)
    y = (z - mean) / jnp.sqrt(var + BN_EPS) * params["gamma"][0, 0] + params["beta"][0, 0]
    y = jax.nn.relu(y).reshape(B, -1)                        # flatten(1)
    h = jax.nn.relu(y @ params["w1"] + params["b1"])
    return jnp.tanh(h @ params["w2"] + params["b2"])


if __name__ == "__main__":
    key = jax.random.PRNGKey(0)
    kx, kp = jax.random.split(key)

    B, C, L = 2, 32, 9                                       # batch, in_features, boardLength
    x = jax.random.normal(kx, (B, C, L, L), jnp.float32)     # NCHW, like the PyTorch module
    params = init_params(kp, in_features=C, board_length=L)

    out = jax.block_until_ready(value_net_forward(x, params))
    ref = value_net_reference(x, params)

    assert out.shape == (B, 1), out.shape
    assert jnp.allclose(out, ref, atol=1e-4, rtol=1e-4), (out, ref)
    print("KERNEL_OK")
</pallas_src>

<mosaic_0001>
module attributes {stable_mosaic.version = 11 : i64} {
  func.func @_value_net_kernel(%arg0: memref<4xf32, #tpu.memory_space<smem>>, %arg1: memref<2x32x128xf32, #tpu.memory_space<vmem>>, %arg2: memref<1x32x128xf32, #tpu.memory_space<vmem>>, %arg3: memref<128x32xf32, #tpu.memory_space<vmem>>, %arg4: memref<2x32xf32, #tpu.memory_space<vmem>>, %arg5: memref<2x1xf32, #tpu.memory_space<vmem>>) attributes {dimension_semantics = [], scalar_prefetch = 0 : i64, scratch_operands = 0 : i64, tpu.core_type = #tpu.core_type<tc>} {
    %c0 = arith.constant 0 : index
    %0 = memref.load %arg0[%c0] : memref<4xf32, #tpu.memory_space<smem>>
    %c1 = arith.constant 1 : index
    %1 = memref.load %arg0[%c1] : memref<4xf32, #tpu.memory_space<smem>>
    %c2 = arith.constant 2 : index
    %2 = memref.load %arg0[%c2] : memref<4xf32, #tpu.memory_space<smem>>
    %c3 = arith.constant 3 : index
    %3 = memref.load %arg0[%c3] : memref<4xf32, #tpu.memory_space<smem>>
    %c0_0 = arith.constant 0 : index
    %c0_1 = arith.constant 0 : index
    %c0_2 = arith.constant 0 : index
    %4 = vector.load %arg1[%c0_0, %c0_1, %c0_2] : memref<2x32x128xf32, #tpu.memory_space<vmem>>, vector<2x32x128xf32>
    %c0_3 = arith.constant 0 : index
    %c0_4 = arith.constant 0 : index
    %c0_5 = arith.constant 0 : index
    %5 = vector.load %arg2[%c0_3, %c0_4, %c0_5] : memref<1x32x128xf32, #tpu.memory_space<vmem>>, vector<1x32x128xf32>
    %6 = vector.broadcast %5 : vector<1x32x128xf32> to vector<2x32x128xf32>
    %7 = arith.mulf %4, %6 : vector<2x32x128xf32>
    %cst = arith.constant dense<0.000000e+00> : vector<2x128xf32>
    %8 = vector.multi_reduction <add>, %7, %cst [1] : vector<2x32x128xf32> to vector<2x128xf32>
    %9 = vector.broadcast %0 : f32 to vector<2x128xf32>
    %10 = arith.addf %8, %9 : vector<2x128xf32>
    %11 = tpu.iota {dimensions = array<i32: 1>} : vector<2x128xi32>
    %c81_i32 = arith.constant 81 : i32
    %12 = vector.broadcast %c81_i32 : i32 to vector<2x128xi32>
    %13 = arith.cmpi slt, %11, %12 : vector<2x128xi32>
    %cst_6 = arith.constant 0.000000e+00 : f32
    %14 = vector.broadcast %cst_6 : f32 to vector<2x128xf32>
    %15 = arith.select %13, %10, %14 : vector<2x128xi1>, vector<2x128xf32>
    %16 = vector.shape_cast %15 : vector<2x128xf32> to vector<1x2x128xf32>
    %cst_7 = arith.constant dense<0.000000e+00> : vector<1xf32>
    %17 = vector.multi_reduction <add>, %16, %cst_7 [1, 2] : vector<1x2x128xf32> to vector<1xf32>
    %18 = vector.shape_cast %17 : vector<1xf32> to vector<1x1x1xf32>
    %19 = vector.extract %18[0, 0, 0] : f32 from vector<1x1x1xf32>
    %20 = vector.broadcast %19 : f32 to vector<1x1xf32>
    %21 = arith.mulf %15, %15 : vector<2x128xf32>
    %22 = vector.shape_cast %21 : vector<2x128xf32> to vector<1x2x128xf32>
    %cst_8 = arith.constant dense<0.000000e+00> : vector<1xf32>
    %23 = vector.multi_reduction <add>, %22, %cst_8 [1, 2] : vector<1x2x128xf32> to vector<1xf32>
    %24 = vector.shape_cast %23 : vector<1xf32> to vector<1x1x1xf32>
    %25 = vector.extract %24[0, 0, 0] : f32 from vector<1x1x1xf32>
    %26 = vector.broadcast %25 : f32 to vector<1x1xf32>
    %cst_9 = arith.constant 0.00617283955 : f32
    %27 = vector.broadcast %cst_9 : f32 to vector<1x1xf32>
    %28 = arith.mulf %20, %27 : vector<1x1xf32>
    %cst_10 = arith.constant 0.00617283955 : f32
    %29 = vector.broadcast %cst_10 : f32 to vector<1x1xf32>
    %30 = arith.mulf %26, %29 : vector<1x1xf32>
    %31 = arith.mulf %28, %28 : vector<1x1xf32>
    %32 = arith.subf %30, %31 : vector<1x1xf32>
    %cst_11 = arith.constant 9.99999974E-6 : f32
    %33 = vector.broadcast %cst_11 : f32 to vector<1x1xf32>
    %34 = arith.addf %32, %33 : vector<1x1xf32>
    %35 = math.rsqrt %34 : vector<1x1xf32>
    %36 = vector.broadcast %1 : f32 to vector<1x1xf32>
    %37 = arith.mulf %36, %35 : vector<1x1xf32>
    %38 = arith.mulf %28, %37 : vector<1x1xf32>
    %39 = vector.broadcast %2 : f32 to vector<1x1xf32>
    %40 = arith.subf %39, %38 : vector<1x1xf32>
    %41 = vector.broadcast %37 : vector<1x1xf32> to vector<2x128xf32>
    %42 = arith.mulf %10, %41 : vector<2x128xf32>
    %43 = vector.broadcast %40 : vector<1x1xf32> to vector<2x128xf32>
    %44 = arith.addf %42, %43 : vector<2x128xf32>
    %cst_12 = arith.constant 0.000000e+00 : f32
    %45 = vector.broadcast %cst_12 : f32 to vector<2x128xf32>
    %46 = arith.maximumf %44, %45 : vector<2x128xf32>
    %c0_13 = arith.constant 0 : index
    %c0_14 = arith.constant 0 : index
    %47 = vector.load %arg3[%c0_13, %c0_14] : memref<128x32xf32, #tpu.memory_space<vmem>>, vector<128x32xf32>
    %cst_15 = arith.constant dense<0.000000e+00> : vector<2x32xf32>
    %48 = tpu.matmul %46, %47, %cst_15 {dimension_numbers = #tpu.dot_dimension_numbers<[1], [0], [0], [1], [0, 0, 1, 1], [], []>} : vector<2x128xf32>, vector<128x32xf32>, vector<2x32xf32> -> vector<2x32xf32>
    %c0_16 = arith.constant 0 : index
    %c0_17 = arith.constant 0 : index
    %49 = vector.load %arg4[%c0_16, %c0_17] : memref<2x32xf32, #tpu.memory_space<vmem>>, vector<1x32xf32>
    %50 = vector.broadcast %49 : vector<1x32xf32> to vector<2x32xf32>
    %51 = arith.addf %48, %50 : vector<2x32xf32>
    %cst_18 = arith.constant 0.000000e+00 : f32
    %52 = vector.broadcast %cst_18 : f32 to vector<2x32xf32>
    %53 = arith.maximumf %51, %52 : vector<2x32xf32>
    %c1_19 = arith.constant 1 : index
    %c0_20 = arith.constant 0 : index
    %54 = vector.load %arg4[%c1_19, %c0_20] : memref<2x32xf32, #tpu.memory_space<vmem>>, vector<1x32xf32>
    %55 = vector.broadcast %54 : vector<1x32xf32> to vector<2x32xf32>
    %56 = arith.mulf %53, %55 : vector<2x32xf32>
    %cst_21 = arith.constant dense<0.000000e+00> : vector<2xf32>
    %57 = vector.multi_reduction <add>, %56, %cst_21 [1] : vector<2x32xf32> to vector<2xf32>
    %58 = vector.shape_cast %57 : vector<2xf32> to vector<2x1xf32>
    %59 = vector.broadcast %3 : f32 to vector<2x1xf32>
    %60 = arith.addf %58, %59 : vector<2x1xf32>
    %61 = math.tanh %60 : vector<2x1xf32>
    %c0_22 = arith.constant 0 : index
    %c0_23 = arith.constant 0 : index
    %62 = vector.load %arg5[%c0_22, %c0_23] : memref<2x1xf32, #tpu.memory_space<vmem>>, vector<2x1xf32>
    tpu.vector_store %arg5[%c0_22, %c0_23], %61 {strides = array<i32>} : memref<2x1xf32, #tpu.memory_space<vmem>>, vector<2x1xf32>,
    return
  }
}

</mosaic_0001>

<llo_original>
// kernel: tpu_custom_call.1
$region0: #{tpu_custom_call.1}
  #allocation0 [shape = 'u32[]', space=smem, size = 0x4, offset = 0x4, fixed_abs, tag = 'smem constant byte address 0x4 - core index']
  #allocation1 [shape = 'u32[144,128]{1,0:T(1,128)}', space=vmem, size = 0x12000, scoped, tag = 'internal scratch']
  %s0 = inlined_call_operand.vmem [shape: f32[4], index: 0, kind: input, shape index: {}]
  %s1 = inlined_call_operand.vmem [shape: f32[2,32,128], index: 1, kind: input, shape index: {}]
  %s2 = inlined_call_operand.vmem [shape: f32[1,32,128], index: 2, kind: input, shape index: {}]
  %s3 = inlined_call_operand.vmem [shape: f32[128,32], index: 3, kind: input, shape index: {}]
  %s4 = inlined_call_operand.vmem [shape: f32[2,32], index: 4, kind: input, shape index: {}]
  %s5 = inlined_call_operand.vmem [shape: f32[2,1], index: 5, kind: output, shape index: {}]
  %s6 = sld [smem:[#allocation0]]
  $region34: #{tpu_custom_call.1} parent=0
    _
  %s8 = ssub.s32 1, %s6
  %s9 = scalar_select 0, %s8, %s6
  $region1: #{tpu_custom_call.1} parent=0
    #allocation2 [shape = 'u8[512]{0}', space=smem, size = 0x200, scoped, tag = 'input window, operand 0, single buffered']
    #allocation3 [shape = 's32[1]{0}', space=sflag, size = 0x4, scoped, tag = 'scoped memory for tpu_custom_call.1']
    %10 = vsyncpa [#allocation3], 0
    // Predicated region
    $region2: #{tpu_custom_call.1} parent=1 // pred_check
      _
    $region3: #{tpu_custom_call.1} parent=1 // pred_check_branch
      %12 = sbr.rel (0) target = $region5
    $region4: #{tpu_custom_call.1} parent=1 // pred_region
      %s14 = ssub.s32 16, 16
      %15 = vsyncadd [#allocation3], %s14
      %s17 = sshll.u32 %s0, 4
      %s18 = int_to_ptr.vmem [resolvable:$true] %s17
      %20 = dma.vmem_to_smem %s18, 16, [#allocation2], [#allocation3]
    $region5: #{tpu_custom_call.1} parent=1 // pred_fallthru
      _
    // Predicated region
    $region6: #{tpu_custom_call.1} parent=1 // pred_check
      _
    $region7: #{tpu_custom_call.1} parent=1 // pred_check_branch
      %22 = sbr.rel (0) target = $region9
    $region8: #{tpu_custom_call.1} parent=1 // pred_region
      _
    $region9: #{tpu_custom_call.1} parent=1 // pred_fallthru
      _
    // Predicated region
    $region10: #{tpu_custom_call.1} parent=1 // pred_check
      _
    $region11: #{tpu_custom_call.1} parent=1 // pred_check_branch
      %24 = sbr.rel (0) target = $region13
    $region12: #{tpu_custom_call.1} parent=1 // pred_region
      _
    $region13: #{tpu_custom_call.1} parent=1 // pred_fallthru
      _
    // Predicated region
    $region14: #{tpu_custom_call.1} parent=1 // pred_check
      _
    $region15: #{tpu_custom_call.1} parent=1 // pred_check_branch
      %26 = sbr.rel (0) target = $region17
    $region16: #{tpu_custom_call.1} parent=1 // pred_region
      _
    $region17: #{tpu_custom_call.1} parent=1 // pred_fallthru
      _
    // Predicated region
    $region18: #{tpu_custom_call.1} parent=1 // pred_check
      _
    $region19: #{tpu_custom_call.1} parent=1 // pred_check_branch
      %28 = sbr.rel (0) target = $region21
    $region20: #{tpu_custom_call.1} parent=1 // pred_region
      _
    $region21: #{tpu_custom_call.1} parent=1 // pred_fallthru
      _
    // Predicated region
    $region22: #{tpu_custom_call.1} parent=1 // pred_check
      _
    $region23: #{tpu_custom_call.1} parent=1 // pred_check_branch
      %30 = sbr.rel (0) target = $region25
    $region24: #{tpu_custom_call.1} parent=1 // pred_region
      %31 = dma.done [#allocation3], 16
    $region25: #{tpu_custom_call.1} parent=1 // pred_fallthru
      _
    %32 = sfence
    %s33 = sld [smem:[#allocation2]]
    %s34 = sld [smem:[#allocation2 + $0x1]]
    %s35 = sld [smem:[#allocation2 + $0x2]]
    %s36 = sld [smem:[#allocation2 + $0x3]]
    %v37 = vld [vmem:[%s1] sm:$0xff]
    %v38 = vld [vmem:[%s1 + $0x8] sm:$0xff]
    %v39 = vld [vmem:[%s1 + $0x10] sm:$0xff]
    %v40 = vld [vmem:[%s1 + $0x18] sm:$0xff]
    %v41 = vld [vmem:[%s1 + $0x20] sm:$0xff]
    %v42 = vld [vmem:[%s1 + $0x28] sm:$0xff]
    %v43 = vld [vmem:[%s1 + $0x30] sm:$0xff]
    %v44 = vld [vmem:[%s1 + $0x38] sm:$0xff]
    %v45 = vld [vmem:[%s2] sm:$0xff]
    %v46 = vld [vmem:[%s2 + $0x8] sm:$0xff]
    %v47 = vld [vmem:[%s2 + $0x10] sm:$0xff]
    %v48 = vld [vmem:[%s2 + $0x18] sm:$0xff]
    %v49 = vmul.f32 %v37, %v45
    %v50 = vmul.f32 %v38, %v46
    %v51 = vmul.f32 %v39, %v47
    %v52 = vmul.f32 %v40, %v48
    %v53 = vmul.f32 %v41, %v45
    %v54 = vmul.f32 %v42, %v46
    %v55 = vmul.f32 %v43, %v47
    %v56 = vmul.f32 %v44, %v48
    %v57 = vadd.f32 %v49, %v50
    %v58 = vadd.f32 %v57, %v51
    %v59 = vadd.f32 %v58, %v52
    %v60 = vrot.slane %v59, 4
    %v61 = vadd.f32 %v59, %v60
    %v62 = vrot.slane %v61, 2
    %v63 = vadd.f32 %v61, %v62
    %v64 = vrot.slane %v63, 1
    %v65 = vadd.f32 %v63, %v64
    %v66 = vadd.f32 %v53, %v54
    %v67 = vadd.f32 %v66, %v55
    %v68 = vadd.f32 %v67, %v56
    %v69 = vrot.slane %v68, 4
    %v70 = vadd.f32 %v68, %v69
    %v71 = vrot.slane %v70, 2
    %v72 = vadd.f32 %v70, %v71
    %v73 = vrot.slane %v72, 1
    %v74 = vadd.f32 %v72, %v73
    %v75 = vstv %s33
    %v76 = vadd.f32 %v65, %v75
    %v77 = vadd.f32 %v74, %v75
    %v78 = vlaneseq
    %v79 = vand.u32 %v78, 127
    %vm80 = vcmp.lt.s32.totalorder %v79, 81
    %vm83 = vcmask 1041409
    %v84 = vsel %vm83, %v77, %v76
    %v86 = vsel %vm80, %v84, 0.0
    %vm87 = vcmask 1041408
    %v88 = vsel %vm87, %v86, 0.0
    %89 = vadd.xlane.f32.xlu0 %v88
    %v90 = vpop.xlane.xlu0 %89
    %v91 = vrot.slane %v90, 4
    %v92 = vadd.f32 %v90, %v91
    %v93 = vrot.slane %v92, 2
    %v94 = vadd.f32 %v92, %v93
    %v95 = vrot.slane %v94, 1
    %v96 = vadd.f32 %v94, %v95
    %s97 = vtos %v96
    %v98 = vstv %s97
    %v99 = vmul.f32 %v86, %v86
    %v100 = vsel %vm87, %v99, 0.0
    %101 = vadd.xlane.f32.xlu0 %v100
    %v102 = vpop.xlane.xlu0 %101
    %v103 = vrot.slane %v102, 4
    %v104 = vadd.f32 %v102, %v103
    %v105 = vrot.slane %v104, 2
    %v106 = vadd.f32 %v104, %v105
    %v107 = vrot.slane %v106, 1
    %v108 = vadd.f32 %v106, %v107
    %s109 = vtos %v108
    %v110 = vstv %s109
    %v111 = vmul.f32 %v98, 0.0061728396
    %v112 = vmul.f32 %v110, 0.0061728396
    %v113 = vmul.f32 %v111, %v111
    %v114 = vsub.f32 %v112, %v113
    %v115 = vadd.f32 %v114, 1e-05
    %v116 = vrsqrt.pop %v115
    %v117 = vstv %s34
    %v118 = vmul.f32 %v117, %v116
    %v119 = vmul.f32 %v111, %v118
    %v120 = vstv %s35
    %v121 = vsub.f32 %v120, %v119
    %v122 = vmul.f32 %v76, %v118
    %v123 = vmul.f32 %v77, %v118
    %v124 = vadd.f32 %v122, %v121
    %v125 = vadd.f32 %v123, %v121
    %v126 = vmax.f32 %v124, 0.0
    %v127 = vmax.f32 %v125, 0.0
    %v128 = vld [vmem:[%s3] sm:$0xff]
    %v129 = vld [vmem:[%s3 + $0x8] sm:$0xff]
    %v130 = vld [vmem:[%s3 + $0x10] sm:$0xff]
    %v131 = vld [vmem:[%s3 + $0x18] sm:$0xff]
    %v132 = vld [vmem:[%s3 + $0x20] sm:$0xff]
    %v133 = vld [vmem:[%s3 + $0x28] sm:$0xff]
    %v134 = vld [vmem:[%s3 + $0x30] sm:$0xff]
    %v135 = vld [vmem:[%s3 + $0x38] sm:$0xff]
    %v136 = vld [vmem:[%s3 + $0x40] sm:$0xff]
    %v137 = vld [vmem:[%s3 + $0x48] sm:$0xff]
    %v138 = vld [vmem:[%s3 + $0x50] sm:$0xff]
    %v139 = vld [vmem:[%s3 + $0x58] sm:$0xff]
    %v140 = vld [vmem:[%s3 + $0x60] sm:$0xff]
    %v141 = vld [vmem:[%s3 + $0x68] sm:$0xff]
    %v142 = vld [vmem:[%s3 + $0x70] sm:$0xff]
    %v143 = vld [vmem:[%s3 + $0x78] sm:$0xff]
    %v144 = vld [vmem:[%s4] sm:$0x1]
    %v145 = vlaneseq
    %v146 = vshrl.u32 %v145, 7
    %v147 = vsub.s32 0, %v146
    %v148 = vrot.slane %v144, %v147
    %v151 = vsel %vm83, %v127, %v126
    %153 = vmatprep.subr.mxu0 0.0
    %154 = vmatpush1.msra.mxu0 %v128
    %155 = vmatprep.subr.mxu0 0.0
    %156 = vmatpush1.msra.mxu0 %v129
    %157 = vmatprep.subr.mxu0 0.0
    %158 = vmatpush1.msra.mxu0 %v130
    %159 = vmatprep.subr.mxu0 0.0
    %160 = vmatpush1.msra.mxu0 %v131
    %161 = vmatprep.subr.mxu0 0.0
    %162 = vmatpush1.msra.mxu0 %v132
    %163 = vmatprep.subr.mxu0 0.0
    %164 = vmatpush1.msra.mxu0 %v133
    %165 = vmatprep.subr.mxu0 0.0
    %166 = vmatpush1.msra.mxu0 %v134
    %167 = vmatprep.subr.mxu0 0.0
    %168 = vmatpush1.msra.mxu0 %v135
    %169 = vmatprep.subr.mxu0 0.0
    %170 = vmatpush1.msra.mxu0 %v136
    %171 = vmatprep.subr.mxu0 0.0
    %172 = vmatpush1.msra.mxu0 %v137
    %173 = vmatprep.subr.mxu0 0.0
    %174 = vmatpush1.msra.mxu0 %v138
    %175 = vmatprep.subr.mxu0 0.0
    %176 = vmatpush1.msra.mxu0 %v139
    %177 = vmatprep.subr.mxu0 0.0
    %178 = vmatpush1.msra.mxu0 %v140
    %179 = vmatprep.subr.mxu0 0.0
    %180 = vmatpush1.msra.mxu0 %v141
    %181 = vmatprep.subr.mxu0 0.0
    %182 = vmatpush1.msra.mxu0 %v142
    %183 = vmatprep.subr.mxu0 0.0
    %184 = vmatpush1.msra.mxu0 %v143
    %185 = vmatprep.subr.mxu0 0.0
    %186 = vmatpush1.msra.mxu0 0.0
    %187 = vmatprep.subr.mxu0 0.0
    %188 = vmatpush1.msra.mxu0 0.0
    %189 = vmatprep.subr.mxu0 0.0
    %190 = vmatpush1.msra.mxu0 0.0
    %191 = vmatprep.subr.mxu0 0.0
    %192 = vmatpush1.msra.mxu0 0.0
    %193 = vmatprep.subr.mxu0 0.0
    %194 = vmatpush1.msra.mxu0 0.0
    %195 = vmatprep.subr.mxu0 0.0
    %196 = vmatpush1.msra.mxu0 0.0
    %197 = vmatprep.subr.mxu0 0.0
    %198 = vmatpush1.msra.mxu0 0.0
    %199 = vmatprep.subr.mxu0 0.0
    %200 = vmatpush1.msra.mxu0 0.0
    %201 = vmatprep.subr.mxu0 0.0
    %202 = vmatpush1.msra.mxu0 0.0
    %203 = vmatprep.subr.mxu0 0.0
    %204 = vmatpush1.msra.mxu0 0.0
    %205 = vmatprep.subr.mxu0 0.0
    %206 = vmatpush1.msra.mxu0 0.0
    %207 = vmatprep.subr.mxu0 0.0
    %208 = vmatpush1.msra.mxu0 0.0
    %209 = vmatprep.subr.mxu0 0.0
    %210 = vmatpush1.msra.mxu0 0.0
    %211 = vmatprep.subr.mxu0 0.0
    %212 = vmatpush1.msra.mxu0 0.0
    %213 = vmatprep.subr.mxu0 0.0
    %214 = vmatpush1.msra.mxu0 0.0
    %215 = vmatprep.subr.mxu0 0.0
    %216 = vmatpush1.msra.mxu0 0.0
    %217 = vmatprep.mubr.f32.mxu0 0.0
    %218 = vmatmul.mubr.f32.gmra.mrb[0].mxu0 %v151
    %v219 = vpop.f32.mrb[0].mxu0
    %v220 = vadd.f32 %v148, %v219
    %v221 = vpop.f32.mrb[0].mxu0
    %222 = vdwg.mxu0
    %v223 = vmax.f32 %v220, 0.0
    %v224 = vld [vmem:[%s4 + $0x1] sm:$0x1]
    %v225 = vlaneseq
    %v226 = vshrl.u32 %v225, 7
    %v227 = vsub.s32 0, %v226
    %v228 = vrot.slane %v224, %v227
    %v229 = vmul.f32 %v223, %v228
    %vm230 = vcmask 254976
    %v231 = vsel %vm230, %v229, 0.0
    %232 = vadd.xlane.f32.xlu0 %v231
    %v233 = vpop.xlane.xlu0 %232
    %v234 = vstv %s36
    %v235 = vadd.f32 %v233, %v234
    %v236 = vtanh.pop %v235
    %vm237 = vcmask 1024
    %238 = vst.msk [vmem:[%s5] sm:$0x3] %vm237, %v236
    // Predicated region
    $region26: #{tpu_custom_call.1} parent=1 // pred_check
      _
    $region27: #{tpu_custom_call.1} parent=1 // pred_check_branch
      %240 = sbr.rel (0) target = $region29
    $region28: #{tpu_custom_call.1} parent=1 // pred_region
      _
    $region29: #{tpu_custom_call.1} parent=1 // pred_fallthru
      _
    // Predicated region
    $region30: #{tpu_custom_call.1} parent=1 // pred_check
      _
    $region31: #{tpu_custom_call.1} parent=1 // pred_check_branch
      %242 = sbr.rel (0) target = $region33
    $region32: #{tpu_custom_call.1} parent=1 // pred_region
      _
    $region33: #{tpu_custom_call.1} parent=1 // pred_fallthru
      _
    %243 = vsyncpa [#allocation3], 1

</llo_original>
